<compile_context>
chip_gen: v5e
topology: v5e:2x2
jax: 0.10.0
libtpu: 0.0.40
codegen_flags: <defaults>
</compile_context>

<pallas_src>
import jax
import jax.numpy as jnp
import numpy as np
from jax.experimental import pallas as pl
from jax.experimental.pallas import tpu as pltpu


def _make_kernel(D, s0, s1, out_dtype):
    """Build the kernel with img_size scale + feature width baked in."""
    s0 = float(s0)
    s1 = float(s1)

    def kernel(x_ref, out_ref):
        x = x_ref[...].astype(jnp.float32)                 # (Nt, D), f32 compute
        Nt = x.shape[0]
        lane = jax.lax.broadcasted_iota(jnp.int32, (Nt, D), 1)

        # --- cx / cy / w / h as (Nt, 1) columns via masked lane reductions ---
        # (keeps data in its natural lane layout; avoids misaligned slices)
        def col(k):
            return jnp.sum(jnp.where(lane == k, x, 0.0), axis=-1, keepdims=True)

        cx, cy, w, h = col(0), col(1), col(2), col(3)

        # --- class max / first-argmax over the full-width tile -------------
        cls = jnp.where(lane >= 4, x, -jnp.inf)            # box lanes masked out
        scores = jnp.max(cls, axis=-1, keepdims=True)      # (Nt, 1)
        hits = jnp.where((lane >= 4) & (cls == scores), lane, D)
        labels = (jnp.min(hits, axis=-1, keepdims=True) - 4).astype(jnp.float32)
        # NOTE: all-NaN class rows would yield an out-of-range label (same as
        # the previous version); torch.max is also unspecified there.

        # --- assemble (Nt, 6) = [x1, y1, x2, y2, score, label] --------------
        # cxcywh -> xyxy and img_size scaling done on the VPU, constants baked.
        lane6 = jax.lax.broadcasted_iota(jnp.int32, (Nt, 6), 1)
        even = (lane6 % 2) == 0
        ctr = jnp.where(even, cx, cy)                      # (Nt, 6)
        ext = jnp.where(even, w, h)
        sgn = jnp.where(lane6 < 2, -0.5, 0.5).astype(jnp.float32)
        scl = jnp.where(even, s1, s0).astype(jnp.float32)
        box = (ctr + sgn * ext) * scl                      # valid on lanes 0..3

        res = jnp.where(lane6 < 4, box,
                        jnp.where(lane6 == 4, scores, labels))
        out_ref[...] = res.astype(out_dtype)

    return kernel


def _pick_row_tile(m, cap=512):
    """Largest multiple-of-8 tile <= cap that divides m, else the whole array."""
    if m <= cap:
        return m
    t = (cap // 8) * 8
    while t >= 8:
        if m % t == 0:
            return t
        t -= 8
    return m


def deepstream_output(x, img_size):
    """x: (B, N, 4 + C), img_size: (s0, s1). Returns (B, N, 6)."""
    B, N, D = x.shape
    assert D >= 6, "need at least 2 classes (D = 4 + num_classes >= 6)"
    dtype = x.dtype

    M = B * N
    x2 = x.reshape(M, D)                                   # fold batch into rows
    nt = _pick_row_tile(M)
    grid = (M // nt,)

    kernel = _make_kernel(D, float(img_size[0]), float(img_size[1]), dtype)

    itemsize = jnp.dtype(dtype).itemsize
    cost = pl.CostEstimate(
        flops=10 * M,
        transcendentals=0,
        bytes_accessed=M * (D + 6) * itemsize,
    )

    out = pl.pallas_call(
        kernel,
        out_shape=jax.ShapeDtypeStruct((M, 6), dtype),
        grid_spec=pltpu.PrefetchScalarGridSpec(
            num_scalar_prefetch=0,
            grid=grid,
            in_specs=[pl.BlockSpec((nt, D), lambda i: (i, 0))],
            out_specs=pl.BlockSpec((nt, 6), lambda i: (i, 0)),
        ),
        compiler_params=pltpu.CompilerParams(
            dimension_semantics=("parallel",)),
        cost_estimate=cost,
    )(x2)
    return out.reshape(B, N, 6)


def _reference(x, img_size):
    # Mathematically identical to the PyTorch module (the constant 4x4 matmul
    # expands to exactly this arithmetic); done explicitly to avoid MXU
    # precision differences in the check.
    cx, cy, w, h = x[..., 0], x[..., 1], x[..., 2], x[..., 3]
    s0, s1 = float(img_size[0]), float(img_size[1])
    x1 = (cx - 0.5 * w) * s1
    y1 = (cy - 0.5 * h) * s0
    x2 = (cx + 0.5 * w) * s1
    y2 = (cy + 0.5 * h) * s0
    cls = x[..., 4:]
    scores = jnp.max(cls, axis=-1)
    labels = jnp.argmax(cls, axis=-1).astype(x.dtype)
    return jnp.stack([x1, y1, x2, y2, scores, labels], axis=-1)


if __name__ == "__main__":
    key = jax.random.PRNGKey(0)
    B, N, C = 2, 8, 12            # batch, queries, num_classes
    D = 4 + C
    img_size = (32, 48)           # scale applied as [s1, s0, s1, s0]

    kb, ks = jax.random.split(key)
    boxes = jax.random.uniform(kb, (B, N, 4), dtype=jnp.float32)   # cxcywh in [0,1)
    scores = jax.random.uniform(ks, (B, N, C), dtype=jnp.float32)
    x = jnp.concatenate([boxes, scores], axis=-1)                  # (B, N, D)

    out = deepstream_output(x, img_size)
    out = jax.block_until_ready(out)

    ref = _reference(x, img_size)
    np.testing.assert_allclose(np.asarray(out), np.asarray(ref),
                               rtol=1e-5, atol=1e-4)

    print("KERNEL_OK")
</pallas_src>

<mosaic_0001>
module attributes {stable_mosaic.version = 11 : i64} {
  func.func @kernel(%arg0: i32, %arg1: memref<16x16xf32, #tpu.memory_space<vmem>>, %arg2: memref<16x6xf32, #tpu.memory_space<vmem>>) attributes {dimension_semantics = [#tpu.dimension_semantics<parallel>], iteration_bounds = array<i64: 1>, scalar_prefetch = 0 : i64, scratch_operands = 0 : i64, tpu.core_type = #tpu.core_type<tc>, window_params = [{transform_indices = @transform_0, window_bounds = array<i64: 16, 16>}, {transform_indices = @transform_1, window_bounds = array<i64: 16, 6>}]} {
    %c0 = arith.constant 0 : index
    %c0_0 = arith.constant 0 : index
    %0 = vector.load %arg1[%c0, %c0_0] : memref<16x16xf32, #tpu.memory_space<vmem>>, vector<16x16xf32>
    %1 = tpu.iota {dimensions = array<i32: 1>} : vector<16x16xi32>
    %c0_i32 = arith.constant 0 : i32
    %2 = vector.broadcast %c0_i32 : i32 to vector<16x16xi32>
    %3 = arith.cmpi eq, %1, %2 : vector<16x16xi32>
    %cst = arith.constant 0.000000e+00 : f32
    %4 = vector.broadcast %cst : f32 to vector<16x16xf32>
    %5 = arith.select %3, %0, %4 : vector<16x16xi1>, vector<16x16xf32>
    %cst_1 = arith.constant dense<0.000000e+00> : vector<16xf32>
    %6 = vector.multi_reduction <add>, %5, %cst_1 [1] : vector<16x16xf32> to vector<16xf32>
    %7 = vector.shape_cast %6 : vector<16xf32> to vector<16x1xf32>
    %c1_i32 = arith.constant 1 : i32
    %8 = vector.broadcast %c1_i32 : i32 to vector<16x16xi32>
    %9 = arith.cmpi eq, %1, %8 : vector<16x16xi32>
    %cst_2 = arith.constant 0.000000e+00 : f32
    %10 = vector.broadcast %cst_2 : f32 to vector<16x16xf32>
    %11 = arith.select %9, %0, %10 : vector<16x16xi1>, vector<16x16xf32>
    %cst_3 = arith.constant dense<0.000000e+00> : vector<16xf32>
    %12 = vector.multi_reduction <add>, %11, %cst_3 [1] : vector<16x16xf32> to vector<16xf32>
    %13 = vector.shape_cast %12 : vector<16xf32> to vector<16x1xf32>
    %c2_i32 = arith.constant 2 : i32
    %14 = vector.broadcast %c2_i32 : i32 to vector<16x16xi32>
    %15 = arith.cmpi eq, %1, %14 : vector<16x16xi32>
    %cst_4 = arith.constant 0.000000e+00 : f32
    %16 = vector.broadcast %cst_4 : f32 to vector<16x16xf32>
    %17 = arith.select %15, %0, %16 : vector<16x16xi1>, vector<16x16xf32>
    %cst_5 = arith.constant dense<0.000000e+00> : vector<16xf32>
    %18 = vector.multi_reduction <add>, %17, %cst_5 [1] : vector<16x16xf32> to vector<16xf32>
    %19 = vector.shape_cast %18 : vector<16xf32> to vector<16x1xf32>
    %c3_i32 = arith.constant 3 : i32
    %20 = vector.broadcast %c3_i32 : i32 to vector<16x16xi32>
    %21 = arith.cmpi eq, %1, %20 : vector<16x16xi32>
    %cst_6 = arith.constant 0.000000e+00 : f32
    %22 = vector.broadcast %cst_6 : f32 to vector<16x16xf32>
    %23 = arith.select %21, %0, %22 : vector<16x16xi1>, vector<16x16xf32>
    %cst_7 = arith.constant dense<0.000000e+00> : vector<16xf32>
    %24 = vector.multi_reduction <add>, %23, %cst_7 [1] : vector<16x16xf32> to vector<16xf32>
    %25 = vector.shape_cast %24 : vector<16xf32> to vector<16x1xf32>
    %c4_i32 = arith.constant 4 : i32
    %26 = vector.broadcast %c4_i32 : i32 to vector<16x16xi32>
    %27 = arith.cmpi sge, %1, %26 : vector<16x16xi32>
    %cst_8 = arith.constant 0xFF800000 : f32
    %28 = vector.broadcast %cst_8 : f32 to vector<16x16xf32>
    %29 = arith.select %27, %0, %28 : vector<16x16xi1>, vector<16x16xf32>
    %cst_9 = arith.constant dense<0xFF800000> : vector<16xf32>
    %30 = vector.multi_reduction <maximumf>, %29, %cst_9 [1] : vector<16x16xf32> to vector<16xf32>
    %31 = vector.shape_cast %30 : vector<16xf32> to vector<16x1xf32>
    %c4_i32_10 = arith.constant 4 : i32
    %32 = vector.broadcast %c4_i32_10 : i32 to vector<16x16xi32>
    %33 = arith.cmpi sge, %1, %32 : vector<16x16xi32>
    %34 = vector.broadcast %31 : vector<16x1xf32> to vector<16x16xf32>
    %35 = arith.cmpf oeq, %29, %34 : vector<16x16xf32>
    %36 = arith.andi %33, %35 : vector<16x16xi1>
    %c16_i32 = arith.constant 16 : i32
    %37 = vector.broadcast %c16_i32 : i32 to vector<16x16xi32>
    %38 = arith.select %36, %1, %37 : vector<16x16xi1>, vector<16x16xi32>
    %cst_11 = arith.constant dense<2147483647> : vector<16xi32>
    %39 = vector.multi_reduction <minsi>, %38, %cst_11 [1] : vector<16x16xi32> to vector<16xi32>
    %40 = vector.shape_cast %39 : vector<16xi32> to vector<16x1xi32>
    %c4_i32_12 = arith.constant 4 : i32
    %41 = vector.broadcast %c4_i32_12 : i32 to vector<16x1xi32>
    %42 = arith.subi %40, %41 : vector<16x1xi32>
    %43 = arith.sitofp %42 : vector<16x1xi32> to vector<16x1xf32>
    %44 = tpu.iota {dimensions = array<i32: 1>} : vector<16x6xi32>
    %c2_i32_13 = arith.constant 2 : i32
    %c0_i32_14 = arith.constant 0 : i32
    %45 = arith.cmpi eq, %c2_i32_13, %c0_i32_14 : i32
    %c1_i32_15 = arith.constant 1 : i32
    %46 = arith.select %45, %c1_i32_15, %c2_i32_13 : i32
    %47 = vector.broadcast %46 : i32 to vector<16x6xi32>
    %48 = arith.remsi %44, %47 : vector<16x6xi32>
    %c0_i32_16 = arith.constant 0 : i32
    %49 = vector.broadcast %c0_i32_16 : i32 to vector<16x6xi32>
    %50 = arith.cmpi ne, %48, %49 : vector<16x6xi32>
    %c0_i32_17 = arith.constant 0 : i32
    %51 = vector.broadcast %c0_i32_17 : i32 to vector<16x6xi32>
    %52 = arith.cmpi slt, %48, %51 : vector<16x6xi32>
    %c0_i32_18 = arith.constant 0 : i32
    %53 = arith.cmpi slt, %46, %c0_i32_18 : i32
    %54 = vector.broadcast %53 : i1 to vector<16x6xi1>
    %55 = vector.broadcast %54 : vector<16x6xi1> to vector<16x6xi1>
    %56 = arith.xori %52, %55 : vector<16x6xi1>
    %57 = arith.andi %56, %50 : vector<16x6xi1>
    %58 = vector.broadcast %46 : i32 to vector<16x6xi32>
    %59 = arith.addi %48, %58 : vector<16x6xi32>
    %60 = arith.select %57, %59, %48 : vector<16x6xi1>, vector<16x6xi32>
    %c0_i32_19 = arith.constant 0 : i32
    %61 = vector.broadcast %c0_i32_19 : i32 to vector<16x6xi32>
    %62 = arith.cmpi eq, %60, %61 : vector<16x6xi32>
    %63 = vector.shape_cast %7 : vector<16x1xf32> to vector<16x1xf32>
    %64 = vector.broadcast %63 : vector<16x1xf32> to vector<16x6xf32>
    %65 = vector.shape_cast %13 : vector<16x1xf32> to vector<16x1xf32>
    %66 = vector.broadcast %65 : vector<16x1xf32> to vector<16x6xf32>
    %67 = arith.select %62, %64, %66 : vector<16x6xi1>, vector<16x6xf32>
    %68 = vector.shape_cast %19 : vector<16x1xf32> to vector<16x1xf32>
    %69 = vector.broadcast %68 : vector<16x1xf32> to vector<16x6xf32>
    %70 = vector.shape_cast %25 : vector<16x1xf32> to vector<16x1xf32>
    %71 = vector.broadcast %70 : vector<16x1xf32> to vector<16x6xf32>
    %72 = arith.select %62, %69, %71 : vector<16x6xi1>, vector<16x6xf32>
    %c2_i32_20 = arith.constant 2 : i32
    %73 = vector.broadcast %c2_i32_20 : i32 to vector<16x6xi32>
    %74 = arith.cmpi slt, %44, %73 : vector<16x6xi32>
    %cst_21 = arith.constant -5.000000e-01 : f32
    %cst_22 = arith.constant 5.000000e-01 : f32
    %75 = vector.broadcast %cst_21 : f32 to vector<16x6xf32>
    %76 = vector.broadcast %cst_22 : f32 to vector<16x6xf32>
    %77 = arith.select %74, %75, %76 : vector<16x6xi1>, vector<16x6xf32>
    %cst_23 = arith.constant 4.800000e+01 : f32
    %cst_24 = arith.constant 3.200000e+01 : f32
    %78 = vector.broadcast %cst_23 : f32 to vector<16x6xf32>
    %79 = vector.broadcast %cst_24 : f32 to vector<16x6xf32>
    %80 = arith.select %62, %78, %79 : vector<16x6xi1>, vector<16x6xf32>
    %81 = arith.mulf %77, %72 : vector<16x6xf32>
    %82 = arith.addf %67, %81 : vector<16x6xf32>
    %83 = arith.mulf %82, %80 : vector<16x6xf32>
    %c4_i32_25 = arith.constant 4 : i32
    %84 = vector.broadcast %c4_i32_25 : i32 to vector<16x6xi32>
    %85 = arith.cmpi slt, %44, %84 : vector<16x6xi32>
    %c4_i32_26 = arith.constant 4 : i32
    %86 = vector.broadcast %c4_i32_26 : i32 to vector<16x6xi32>
    %87 = arith.cmpi eq, %44, %86 : vector<16x6xi32>
    %88 = vector.shape_cast %31 : vector<16x1xf32> to vector<16x1xf32>
    %89 = vector.broadcast %88 : vector<16x1xf32> to vector<16x6xf32>
    %90 = vector.shape_cast %43 : vector<16x1xf32> to vector<16x1xf32>
    %91 = vector.broadcast %90 : vector<16x1xf32> to vector<16x6xf32>
    %92 = arith.select %87, %89, %91 : vector<16x6xi1>, vector<16x6xf32>
    %93 = arith.select %85, %83, %92 : vector<16x6xi1>, vector<16x6xf32>
    %c0_27 = arith.constant 0 : index
    %c0_28 = arith.constant 0 : index
    %94 = vector.load %arg2[%c0_27, %c0_28] : memref<16x6xf32, #tpu.memory_space<vmem>>, vector<16x6xf32>
    tpu.vector_store %arg2[%c0_27, %c0_28], %93 {strides = array<i32>} : memref<16x6xf32, #tpu.memory_space<vmem>>, vector<16x6xf32>,
    return
  }
  func.func @transform_0(%arg0: i32) -> (i32, i32) {
    %c0_i32 = arith.constant 0 : i32
    %c0_i32_0 = arith.constant 0 : i32
    return %arg0, %c0_i32 : i32, i32
  }
  func.func @transform_1(%arg0: i32) -> (i32, i32) {
    %c0_i32 = arith.constant 0 : i32
    %c0_i32_0 = arith.constant 0 : i32
    return %arg0, %c0_i32 : i32, i32
  }
}

</mosaic_0001>

<llo_original>
// kernel: tpu_custom_call.1
$region0: #{tpu_custom_call.1}
  #allocation0 [shape = 'u32[]', space=smem, size = 0x4, offset = 0x4, fixed_abs, tag = 'smem constant byte address 0x4 - core index']
  #allocation1 [shape = 'u32[72,128]{1,0:T(1,128)}', space=vmem, size = 0x9000, scoped, tag = 'internal scratch']
  %s0 = inlined_call_operand.hbm [shape: f32[16,16], index: 0, kind: input, shape index: {}]
  %s1 = inlined_call_operand.vmem [shape: f32[16,6], index: 1, kind: output, shape index: {}]
  %s2 = sld [smem:[#allocation0]]
  $region18: #{tpu_custom_call.1} parent=0
    _
  %s4 = ssub.s32 1, %s2
  %s5 = scalar_select 0, %s4, %s2
  $region1: #{tpu_custom_call.1} parent=0
    #allocation2 [shape = 'u8[8192]{0}', space=vmem, size = 0x2000, scoped, tag = 'input window, operand 0, single buffered']
    #allocation3 [shape = 's32[1]{0}', space=sflag, size = 0x4, scoped, tag = 'scoped memory for tpu_custom_call.1']
    %6 = vsyncpa [#allocation3], 0
    // Predicated region
    $region2: #{tpu_custom_call.1} parent=1 // pred_check
      _
    $region3: #{tpu_custom_call.1} parent=1 // pred_check_branch
      %8 = sbr.rel (0) target = $region5
    $region4: #{tpu_custom_call.1} parent=1 // pred_region
      %10 = vsyncadd [#allocation3], 0
      %s11 = sshll.u32 %s0, 4
      %s12 = int_to_ptr.hbm [resolvable:$true] %s11
      %s13 = sshll.u32 [#allocation2], 4
      %s14 = int_to_ptr.vmem [resolvable:$true] %s13
      %19 = dma.hbm_to_vmem [thread:$0]  %s12, 256, %s14, [#allocation3], 128, 128, 8
    $region5: #{tpu_custom_call.1} parent=1 // pred_fallthru
      _
    // Predicated region
    $region6: #{tpu_custom_call.1} parent=1 // pred_check
      _
    $region7: #{tpu_custom_call.1} parent=1 // pred_check_branch
      %21 = sbr.rel (0) target = $region9
    $region8: #{tpu_custom_call.1} parent=1 // pred_region
      %23 = dma.done [#allocation3], 256
    $region9: #{tpu_custom_call.1} parent=1 // pred_fallthru
      _
    %v24 = vld [vmem:[#allocation2] sm:$0xff]
    %v25 = vld [vmem:[#allocation2 + $0x8] sm:$0xff]
    %v26 = vlaneseq
    %v27 = vand.u32 %v26, 127
    %vm28 = vcmp.eq.s32.totalorder %v27, 0
    %v29 = vsel %vm28, %v24, 0.0
    %v30 = vsel %vm28, %v25, 0.0
    %vm31 = vcmask 130048
    %v32 = vsel %vm31, %v29, 0.0
    %33 = vadd.xlane.f32.xlu0 %v32
    %v34 = vpop.xlane.xlu0 %33
    %v35 = vsel %vm31, %v30, 0.0
    %36 = vadd.xlane.f32.xlu0 %v35
    %v37 = vpop.xlane.xlu0 %36
    %vm38 = vcmp.eq.s32.totalorder %v27, 1
    %v39 = vsel %vm38, %v24, 0.0
    %v40 = vsel %vm38, %v25, 0.0
    %v41 = vsel %vm31, %v39, 0.0
    %42 = vadd.xlane.f32.xlu0 %v41
    %v43 = vpop.xlane.xlu0 %42
    %v44 = vsel %vm31, %v40, 0.0
    %45 = vadd.xlane.f32.xlu0 %v44
    %v46 = vpop.xlane.xlu0 %45
    %vm47 = vcmp.eq.s32.totalorder %v27, 2
    %v48 = vsel %vm47, %v24, 0.0
    %v49 = vsel %vm47, %v25, 0.0
    %v50 = vsel %vm31, %v48, 0.0
    %51 = vadd.xlane.f32.xlu0 %v50
    %v52 = vpop.xlane.xlu0 %51
    %v53 = vsel %vm31, %v49, 0.0
    %54 = vadd.xlane.f32.xlu0 %v53
    %v55 = vpop.xlane.xlu0 %54
    %vm56 = vcmp.eq.s32.totalorder %v27, 3
    %v57 = vsel %vm56, %v24, 0.0
    %v58 = vsel %vm56, %v25, 0.0
    %v59 = vsel %vm31, %v57, 0.0
    %60 = vadd.xlane.f32.xlu0 %v59
    %v61 = vpop.xlane.xlu0 %60
    %v62 = vsel %vm31, %v58, 0.0
    %63 = vadd.xlane.f32.xlu0 %v62
    %v64 = vpop.xlane.xlu0 %63
    %vm65 = vcmp.ge.s32.totalorder %v27, 4
    %v66 = vsel %vm65, %v24, -inf
    %v67 = vsel %vm65, %v25, -inf
    %v68 = vsel %vm31, %v66, -inf
    %69 = vmax.xlane.f32.xlu0 %v68
    %v70 = vpop.xlane.xlu0 %69
    %v71 = vsel %vm31, %v67, -inf
    %72 = vmax.xlane.f32.xlu0 %v71
    %v73 = vpop.xlane.xlu0 %72
    %vm74 = vcmp.eq.f32.partialorder %v66, %v70
    %vm75 = vcmp.eq.f32.partialorder %v67, %v73
    %vm76 = vmand %vm65, %vm74
    %vm77 = vmand %vm65, %vm75
    %v78 = vsel %vm76, %v27, 16
    %v79 = vsel %vm77, %v27, 16
    %v80 = vsel %vm31, %v78, 2147483647
    %v81 = vand.u32 %v80, 65535
    %v82 = vshra.s32 %v80, 16
    %v83 = vcvt.s32.f32 %v81
    %v84 = vcvt.s32.f32 %v82
    %85 = vmin.xlane.f32.xlu0 %v84
    %v86 = vpop.xlane.xlu0 %85
    %vm87 = vcmp.eq.f32.partialorder %v84, %v86
    %v88 = vsel %vm87, %v83, inf
    %89 = vmin.xlane.f32.xlu0 %v88
    %v90 = vpop.xlane.xlu0 %89
    %v91 = vcvt.f32.s32 %v90
    %v92 = vcvt.f32.s32 %v86
    %v93 = vshll.u32 %v92, 16
    %v94 = vadd.s32 %v93, %v91
    %v95 = vsel %vm31, %v79, 2147483647
    %v96 = vand.u32 %v95, 65535
    %v97 = vshra.s32 %v95, 16
    %v98 = vcvt.s32.f32 %v96
    %v99 = vcvt.s32.f32 %v97
    %100 = vmin.xlane.f32.xlu0 %v99
    %v101 = vpop.xlane.xlu0 %100
    %vm102 = vcmp.eq.f32.partialorder %v99, %v101
    %v103 = vsel %vm102, %v98, inf
    %104 = vmin.xlane.f32.xlu0 %v103
    %v105 = vpop.xlane.xlu0 %104
    %v106 = vcvt.f32.s32 %v105
    %v107 = vcvt.f32.s32 %v101
    %v108 = vshll.u32 %v107, 16
    %v109 = vadd.s32 %v108, %v106
    %v110 = vsub.s32 %v94, 4
    %v111 = vsub.s32 %v109, 4
    %v112 = vcvt.s32.f32 %v110
    %v113 = vcvt.s32.f32 %v111
    %vm114 = vcmp.lt.s32.totalorder %v27, 0
    %v115 = vsub.s32 0, %v27
    %v116 = vsel %vm114, %v115, %v27
    %v117 = vshrl.u32 %v116, 1
    %v118 = vand.u32 %v116, 1
    %v119 = vsub.s32 0, %v118
    %v120 = vsel %vm114, %v119, %v118
    %vm121 = vcmp.ne.s32.totalorder %v120, 0
    %vm122 = vcmp.lt.s32.totalorder %v120, 0
    %vm123 = vmand %vm122, %vm121
    %v124 = vadd.s32 %v120, 2
    %v125 = vsel %vm123, %v124, %v120
    %vm126 = vcmp.eq.s32.totalorder %v125, 0
    %v127 = vsel %vm126, %v34, %v43
    %v128 = vsel %vm126, %v37, %v46
    %v129 = vsel %vm126, %v52, %v61
    %v130 = vsel %vm126, %v55, %v64
    %vm131 = vcmp.lt.s32.totalorder %v27, 2
    %v132 = vsel %vm131, -0.5, 0.5
    %v133 = vsel %vm126, 48.0, 32.0
    %v134 = vmul.f32 %v132, %v129
    %v135 = vmul.f32 %v132, %v130
    %v136 = vadd.f32 %v127, %v134
    %v137 = vadd.f32 %v128, %v135
    %v138 = vmul.f32 %v136, %v133
    %v139 = vmul.f32 %v137, %v133
    %vm140 = vcmp.lt.s32.totalorder %v27, 4
    %vm141 = vcmp.eq.s32.totalorder %v27, 4
    %v142 = vsel %vm141, %v70, %v112
    %v143 = vsel %vm141, %v73, %v113
    %v144 = vsel %vm140, %v138, %v142
    %v145 = vsel %vm140, %v139, %v143
    %vm146 = vcmask 48128
    %147 = vst.msk [vmem:[%s1] sm:$0xff] %vm146, %v144
    %148 = vst.msk [vmem:[%s1 + $0x8] sm:$0xff] %vm146, %v145
    // Predicated region
    $region10: #{tpu_custom_call.1} parent=1 // pred_check
      _
    $region11: #{tpu_custom_call.1} parent=1 // pred_check_branch
      %150 = sbr.rel (0) target = $region13
    $region12: #{tpu_custom_call.1} parent=1 // pred_region
      _
    $region13: #{tpu_custom_call.1} parent=1 // pred_fallthru
      _
    // Predicated region
    $region14: #{tpu_custom_call.1} parent=1 // pred_check
      _
    $region15: #{tpu_custom_call.1} parent=1 // pred_check_branch
      %152 = sbr.rel (0) target = $region17
    $region16: #{tpu_custom_call.1} parent=1 // pred_region
      _
    $region17: #{tpu_custom_call.1} parent=1 // pred_fallthru
      _
    %153 = vsyncpa [#allocation3], 1

</llo_original>
